<compile_context>
chip_gen: v5e
topology: v5e:2x2
jax: 0.10.0
libtpu: 0.0.40
codegen_flags: <defaults>
</compile_context>

<pallas_src>
import functools

import jax
import jax.numpy as jnp
from jax import lax
from jax.experimental import pallas as pl
from jax.experimental.pallas import tpu as pltpu


def _elu_plus_one(x):
    # TODO(synk): `feature_map` is an injected module in the PyTorch code; we use
    # the standard linear-attention map phi(x) = ELU(x) + 1 (is_query ignored).
    return jnp.where(x > 0, x + 1.0, jnp.exp(jnp.minimum(x, 0.0)))


# ---------------------------------------------------------------------------
# Pass A: accumulate kv_full and k_sum over token tiles (sequential reduction).
# ---------------------------------------------------------------------------
def _kv_accum_kernel(x_ref, wkv_ref, bkv_ref, hmask_ref, kv_ref, ksum_ref, *,
                     dim_qk, n_tokens, tile_n, mask_pad):
    t = pl.program_id(0)

    @pl.when(t == 0)
    def _():
        kv_ref[...] = jnp.zeros_like(kv_ref)
        ksum_ref[...] = jnp.zeros_like(ksum_ref)

    x = x_ref[...]
    h = jnp.dot(x, wkv_ref[...],
                preferred_element_type=jnp.float32) + bkv_ref[...]
    k = _elu_plus_one(h[:, :dim_qk])               # [tile, dim_qk]
    v = h[:, dim_qk:]                              # [tile, dim_v]
    if mask_pad:                                   # static: only if N was padded
        row = t * tile_n + lax.broadcasted_iota(jnp.int32, (tile_n, 1), 0)
        k = k * (row < n_tokens).astype(jnp.float32)

    # kv_full += k^T @ v  (contract over tokens); output block is VMEM-resident.
    kv_ref[...] += lax.dot_general(k, v, (((0,), (0,)), ((), ())),
                                   preferred_element_type=jnp.float32)
    ksum_ref[...] += jnp.sum(k, axis=0, keepdims=True)

    @pl.when(t == pl.num_programs(0) - 1)
    def _():
        # Apply the block-diagonal head mask once, instead of per output tile.
        kv_ref[...] = kv_ref[...] * hmask_ref[...]


# ---------------------------------------------------------------------------
# Pass B: per-token-tile attention readout + output projection (parallel map).
# ---------------------------------------------------------------------------
def _attn_out_kernel(x_ref, wqn_ref, bqn_ref, wo_ref, bo_ref,
                     kv_ref, ksum_ref, hmask_ref, o_ref, *, dim_qk):
    x = x_ref[...]
    h = jnp.dot(x, wqn_ref[...],
                preferred_element_type=jnp.float32) + bqn_ref[...]
    q = _elu_plus_one(h[:, :dim_qk])               # [tile, dim_qk]
    non_att = h[:, dim_qk:]                        # [tile, dim_in]

    # kv_ref is already head-masked (pass A), so this is a single plain matmul.
    att = jnp.dot(q, kv_ref[...], preferred_element_type=jnp.float32)
    # denom[n, j] = sum_{i in head(j)} q[n, i] * k_sum[i]  (broadcast over v cols).
    denom = jnp.dot(q * ksum_ref[...], hmask_ref[...],
                    preferred_element_type=jnp.float32)
    denom = jnp.where(denom == 0.0, jnp.float32(1e-5), denom)
    att = att * pl.reciprocal(denom, approx=True)  # EUP, nearly free

    # dropout(p=0.0) is identity; fc_o + residual non-attention path.
    out = non_att + jnp.dot(att, wo_ref[...],
                            preferred_element_type=jnp.float32) + bo_ref[...]
    o_ref[...] = out.astype(o_ref.dtype)


def kernel_self_attn(x, params, *, dim_in, dim_qk, dim_v, n_heads,
                     tile_n=1024, mxu_dtype=None):
    """JAX wrapper: KernelSelfAttn(ord_in=1, ord_out=1) forward."""
    # TODO(synk): the 1->k branch (_1_to_k) depends on hot_pytorch's indexed
    # Linear(1, ord_out, ...) whose definition is not provided; only (1, 1) here.
    assert dim_qk % n_heads == 0 and dim_v % n_heads == 0, \
        "dim_qk and dim_v must be divisible by n_heads"
    w1, b1, wv, bv, wo, bo = params
    n = x.shape[0]
    dh = dim_qk // n_heads
    dv = dim_v // n_heads

    # Fuse projections per pass (both share LHS x):
    #   pass A weight  wkv = [W_k | W_v]
    #   pass B weight  wqn = [W_q | W_nonatt]
    wkv = jnp.concatenate([w1[:, dim_qk:2 * dim_qk], wv], axis=1)
    bkv = jnp.concatenate([b1[:, dim_qk:2 * dim_qk], bv], axis=1)
    wqn = jnp.concatenate([w1[:, :dim_qk], w1[:, 2 * dim_qk:]], axis=1)
    bqn = jnp.concatenate([b1[:, :dim_qk], b1[:, 2 * dim_qk:]], axis=1)

    # Block-diagonal head mask: mask[i, j] = 1 iff qk-col i and v-col j share a head.
    hq = jnp.repeat(jnp.arange(n_heads), dh)
    hv = jnp.repeat(jnp.arange(n_heads), dv)
    hmask = (hq[:, None] == hv[None, :]).astype(jnp.float32)

    # Optional bf16 MXU inputs (v6e / v5e / v7x): halves HBM traffic for x and
    # the projection weights; accumulation and elementwise work stay f32.
    if mxu_dtype is not None:
        x = x.astype(mxu_dtype)
        wkv = wkv.astype(mxu_dtype)
        wqn = wqn.astype(mxu_dtype)

    # Token tiling (sublane axis must be a multiple of 8).
    tile = max(8, min(tile_n, n))
    tile = ((tile + 7) // 8) * 8
    padded_n = pl.cdiv(n, tile) * tile
    if padded_n != n:
        x = jnp.pad(x, ((0, padded_n - n), (0, 0)))
    num_tiles = padded_n // tile

    const = lambda t: (0, 0)   # resident (non-tiled) operands

    # ---- Pass A: kv_full / k_sum reduction over token tiles ------------------
    kv, ksum = pl.pallas_call(
        functools.partial(_kv_accum_kernel, dim_qk=dim_qk, n_tokens=n,
                          tile_n=tile, mask_pad=(padded_n != n)),
        out_shape=(jax.ShapeDtypeStruct((dim_qk, dim_v), jnp.float32),
                   jax.ShapeDtypeStruct((1, dim_qk), jnp.float32)),
        grid_spec=pltpu.PrefetchScalarGridSpec(
            num_scalar_prefetch=0,
            grid=(num_tiles,),
            in_specs=[
                pl.BlockSpec((tile, dim_in), lambda t: (t, 0)),   # x streamed
                pl.BlockSpec(wkv.shape, const),                   # resident
                pl.BlockSpec(bkv.shape, const),
                pl.BlockSpec(hmask.shape, const),
            ],
            out_specs=(pl.BlockSpec((dim_qk, dim_v), const),      # accumulators
                       pl.BlockSpec((1, dim_qk), const)),
        ),
        compiler_params=pltpu.CompilerParams(
            # Output accumulation across the tile axis -> sequential.
            # TODO(synk): per-core kv partials would allow "parallel" here for
            # v7x's two TensorCores.
            dimension_semantics=("arbitrary",)),
    )(x, wkv, bkv, hmask)

    # ---- Pass B: per-tile attention readout + fc_o ----------------------------
    out = pl.pallas_call(
        functools.partial(_attn_out_kernel, dim_qk=dim_qk),
        out_shape=jax.ShapeDtypeStruct((padded_n, dim_in), jnp.float32),
        grid_spec=pltpu.PrefetchScalarGridSpec(
            num_scalar_prefetch=0,
            grid=(num_tiles,),
            in_specs=[
                pl.BlockSpec((tile, dim_in), lambda t: (t, 0)),   # x streamed
                pl.BlockSpec(wqn.shape, const),                   # resident
                pl.BlockSpec(bqn.shape, const),
                pl.BlockSpec(wo.shape, const),
                pl.BlockSpec(bo.shape, const),
                pl.BlockSpec((dim_qk, dim_v), const),             # kv (masked)
                pl.BlockSpec((1, dim_qk), const),                 # k_sum
                pl.BlockSpec(hmask.shape, const),
            ],
            out_specs=pl.BlockSpec((tile, dim_in), lambda t: (t, 0)),
        ),
        compiler_params=pltpu.CompilerParams(
            # Independent per-tile work -> megacore-shardable on v7x.
            dimension_semantics=("parallel",)),
    )(x, wqn, bqn, wo, bo, kv, ksum, hmask)
    return out[:n]


def reference_self_attn(x, params, *, dim_in, dim_qk, dim_v, n_heads):
    """Pure-JAX reference mirroring the PyTorch _1_to_1 semantics."""
    w1, b1, wv, bv, wo, bo = params
    dh = dim_qk // n_heads
    dv = dim_v // n_heads
    h1 = x @ w1 + b1
    q = h1[:, :dim_qk]
    k = h1[:, dim_qk:2 * dim_qk]
    non_att = h1[:, -dim_in:]
    v = x @ wv + bv
    n = x.shape[0]
    qh = _elu_plus_one(jnp.transpose(q.reshape(n, n_heads, dh), (1, 0, 2)))
    kh = _elu_plus_one(jnp.transpose(k.reshape(n, n_heads, dh), (1, 0, 2)))
    vh = jnp.transpose(v.reshape(n, n_heads, dv), (1, 0, 2))
    kv = jnp.einsum('hni,hnj->hij', kh, vh)
    att = jnp.einsum('hni,hij->hnj', qh, kv)
    k_sum = kh.sum(1)
    qk_sum = jnp.einsum('hni,hi->hn', qh, k_sum)[:, :, None]
    qk_sum = jnp.where(qk_sum == 0.0, 1e-5, qk_sum)
    att = att / qk_sum
    att = jnp.concatenate([att[h] for h in range(n_heads)], axis=-1)
    return non_att + att @ wo + bo


def init_params(key, dim_in, dim_qk, dim_v):
    """Deterministic parameter init (xavier-normal weights, zero biases)."""
    d1_out = dim_qk * 2 + dim_in          # fc_1: n_qk1=2, plus non-attention path
    k1, k2, k3 = jax.random.split(key, 3)

    def xavier(k, fan_in, fan_out):
        std = (2.0 / (fan_in + fan_out)) ** 0.5
        return std * jax.random.normal(k, (fan_in, fan_out), jnp.float32)

    w1 = xavier(k1, dim_in, d1_out)
    b1 = jnp.zeros((1, d1_out), jnp.float32)
    wv = xavier(k2, dim_in, dim_v)        # reset_vo_parameters: xavier_normal_
    bv = jnp.zeros((1, dim_v), jnp.float32)
    wo = xavier(k3, dim_v, dim_in)
    bo = jnp.zeros((1, dim_in), jnp.float32)
    return (w1, b1, wv, bv, wo, bo)


if __name__ == "__main__":
    dim_in, dim_qk, dim_v, n_heads = 32, 32, 32, 4
    dims = dict(dim_in=dim_in, dim_qk=dim_qk, dim_v=dim_v, n_heads=n_heads)

    key = jax.random.PRNGKey(0)
    kx1, kx2, kp = jax.random.split(key, 3)
    params = init_params(kp, dim_in, dim_qk, dim_v)

    # (1) single token tile
    x1 = jax.random.normal(kx1, (64, dim_in), jnp.float32)
    out1 = jax.block_until_ready(kernel_self_attn(x1, params, **dims))
    ref1 = reference_self_attn(x1, params, **dims)
    assert out1.shape == (64, dim_in)
    # tolerance accounts for the approx (EUP) reciprocal in the kernel
    assert jnp.allclose(out1, ref1, rtol=1e-2, atol=1e-2), "mismatch (single tile)"

    # (2) multi-tile grid with tail padding (N=200, tile=64 -> 4 tiles)
    x2 = jax.random.normal(kx2, (200, dim_in), jnp.float32)
    out2 = jax.block_until_ready(kernel_self_attn(x2, params, tile_n=64, **dims))
    ref2 = reference_self_attn(x2, params, **dims)
    assert out2.shape == (200, dim_in)
    assert jnp.allclose(out2, ref2, rtol=1e-2, atol=1e-2), "mismatch (multi tile)"

    # (3) bf16 MXU-input path, f32 accumulation
    out3 = jax.block_until_ready(
        kernel_self_attn(x2, params, tile_n=64, mxu_dtype=jnp.bfloat16, **dims))
    assert jnp.allclose(out3, ref2, rtol=5e-2, atol=5e-2), "mismatch (bf16 MXU path)"

    print("KERNEL_OK")
</pallas_src>

<mosaic_0001>
module attributes {stable_mosaic.version = 11 : i64} {
  func.func @_kv_accum_kernel(%arg0: i32, %arg1: memref<64x32xf32, #tpu.memory_space<vmem>>, %arg2: memref<32x64xf32, #tpu.memory_space<vmem>>, %arg3: memref<1x64xf32, #tpu.memory_space<vmem>>, %arg4: memref<32x32xf32, #tpu.memory_space<vmem>>, %arg5: memref<32x32xf32, #tpu.memory_space<vmem>>, %arg6: memref<1x32xf32, #tpu.memory_space<vmem>>) attributes {dimension_semantics = [#tpu.dimension_semantics<arbitrary>], iteration_bounds = array<i64: 1>, scalar_prefetch = 0 : i64, scratch_operands = 0 : i64, tpu.core_type = #tpu.core_type<tc>, window_params = [{transform_indices = @transform_0, window_bounds = array<i64: 64, 32>}, {pipeline_mode = #tpu.pipeline_mode<synchronous>, transform_indices = @transform_1, window_bounds = array<i64: 32, 64>}, {pipeline_mode = #tpu.pipeline_mode<synchronous>, transform_indices = @transform_2, window_bounds = array<i64: 1, 64>}, {pipeline_mode = #tpu.pipeline_mode<synchronous>, transform_indices = @transform_3, window_bounds = array<i64: 32, 32>}, {pipeline_mode = #tpu.pipeline_mode<synchronous>, transform_indices = @transform_4, window_bounds = array<i64: 32, 32>}, {pipeline_mode = #tpu.pipeline_mode<synchronous>, transform_indices = @transform_5, window_bounds = array<i64: 1, 32>}]} {
    %c0_i32 = arith.constant 0 : i32
    %0 = arith.cmpi eq, %arg0, %c0_i32 : i32
    %1 = arith.extui %0 : i1 to i32
    %c0_i32_0 = arith.constant 0 : i32
    %2 = arith.cmpi ne, %1, %c0_i32_0 : i32
    scf.if %2 {
      %cst_21 = arith.constant 0.000000e+00 : f32
      %31 = vector.broadcast %cst_21 : f32 to vector<32x32xf32>
      %c0_22 = arith.constant 0 : index
      %c0_23 = arith.constant 0 : index
      %32 = vector.load %arg5[%c0_22, %c0_23] : memref<32x32xf32, #tpu.memory_space<vmem>>, vector<32x32xf32>
      tpu.vector_store %arg5[%c0_22, %c0_23], %31 {strides = array<i32>} : memref<32x32xf32, #tpu.memory_space<vmem>>, vector<32x32xf32>,
      %cst_24 = arith.constant 0.000000e+00 : f32
      %33 = vector.broadcast %cst_24 : f32 to vector<1x32xf32>
      %c0_25 = arith.constant 0 : index
      %c0_26 = arith.constant 0 : index
      %34 = vector.load %arg6[%c0_25, %c0_26] : memref<1x32xf32, #tpu.memory_space<vmem>>, vector<1x32xf32>
      tpu.vector_store %arg6[%c0_25, %c0_26], %33 {strides = array<i32>} : memref<1x32xf32, #tpu.memory_space<vmem>>, vector<1x32xf32>,
    } else {
    }
    %c0 = arith.constant 0 : index
    %c0_1 = arith.constant 0 : index
    %3 = vector.load %arg1[%c0, %c0_1] : memref<64x32xf32, #tpu.memory_space<vmem>>, vector<64x32xf32>
    %c0_2 = arith.constant 0 : index
    %c0_3 = arith.constant 0 : index
    %4 = vector.load %arg2[%c0_2, %c0_3] : memref<32x64xf32, #tpu.memory_space<vmem>>, vector<32x64xf32>
    %cst = arith.constant dense<0.000000e+00> : vector<64x64xf32>
    %5 = tpu.matmul %3, %4, %cst {dimension_numbers = #tpu.dot_dimension_numbers<[1], [0], [0], [1], [0, 0, 1, 1], [], []>} : vector<64x32xf32>, vector<32x64xf32>, vector<64x64xf32> -> vector<64x64xf32>
    %c0_4 = arith.constant 0 : index
    %c0_5 = arith.constant 0 : index
    %6 = vector.load %arg3[%c0_4, %c0_5] : memref<1x64xf32, #tpu.memory_space<vmem>>, vector<1x64xf32>
    %7 = vector.broadcast %6 : vector<1x64xf32> to vector<64x64xf32>
    %8 = arith.addf %5, %7 : vector<64x64xf32>
    %9 = vector.extract_strided_slice %8 {offsets = [0, 0], sizes = [64, 32], strides = [1, 1]} : vector<64x64xf32> to vector<64x32xf32>
    %cst_6 = arith.constant 0.000000e+00 : f32
    %10 = vector.broadcast %cst_6 : f32 to vector<64x32xf32>
    %11 = arith.cmpf ogt, %9, %10 : vector<64x32xf32>
    %cst_7 = arith.constant 1.000000e+00 : f32
    %12 = vector.broadcast %cst_7 : f32 to vector<64x32xf32>
    %13 = arith.addf %9, %12 : vector<64x32xf32>
    %cst_8 = arith.constant 0.000000e+00 : f32
    %14 = vector.broadcast %cst_8 : f32 to vector<64x32xf32>
    %15 = arith.minimumf %9, %14 : vector<64x32xf32>
    %16 = math.exp %15 : vector<64x32xf32>
    %17 = arith.select %11, %13, %16 : vector<64x32xi1>, vector<64x32xf32>
    %18 = vector.extract_strided_slice %8 {offsets = [0, 32], sizes = [64, 32], strides = [1, 1]} : vector<64x64xf32> to vector<64x32xf32>
    %c0_9 = arith.constant 0 : index
    %c0_10 = arith.constant 0 : index
    %19 = vector.load %arg5[%c0_9, %c0_10] : memref<32x32xf32, #tpu.memory_space<vmem>>, vector<32x32xf32>
    %cst_11 = arith.constant dense<0.000000e+00> : vector<32x32xf32>
    %20 = tpu.matmul %17, %18, %cst_11 {dimension_numbers = #tpu.dot_dimension_numbers<[0], [0], [1], [1], [0, 1, 1, 1], [], []>} : vector<64x32xf32>, vector<64x32xf32>, vector<32x32xf32> -> vector<32x32xf32>
    %21 = arith.addf %19, %20 : vector<32x32xf32>
    %c0_12 = arith.constant 0 : index
    %c0_13 = arith.constant 0 : index
    %22 = vector.load %arg5[%c0_12, %c0_13] : memref<32x32xf32, #tpu.memory_space<vmem>>, vector<32x32xf32>
    tpu.vector_store %arg5[%c0_12, %c0_13], %21 {strides = array<i32>} : memref<32x32xf32, #tpu.memory_space<vmem>>, vector<32x32xf32>,
    %c0_14 = arith.constant 0 : index
    %c0_15 = arith.constant 0 : index
    %23 = vector.load %arg6[%c0_14, %c0_15] : memref<1x32xf32, #tpu.memory_space<vmem>>, vector<1x32xf32>
    %cst_16 = arith.constant dense<0.000000e+00> : vector<32xf32>
    %24 = vector.multi_reduction <add>, %17, %cst_16 [0] : vector<64x32xf32> to vector<32xf32>
    %25 = vector.shape_cast %24 : vector<32xf32> to vector<1x32xf32>
    %26 = arith.addf %23, %25 : vector<1x32xf32>
    %c0_17 = arith.constant 0 : index
    %c0_18 = arith.constant 0 : index
    %27 = vector.load %arg6[%c0_17, %c0_18] : memref<1x32xf32, #tpu.memory_space<vmem>>, vector<1x32xf32>
    tpu.vector_store %arg6[%c0_17, %c0_18], %26 {strides = array<i32>} : memref<1x32xf32, #tpu.memory_space<vmem>>, vector<1x32xf32>,
    %c0_i32_19 = arith.constant 0 : i32
    %28 = arith.cmpi eq, %arg0, %c0_i32_19 : i32
    %29 = arith.extui %28 : i1 to i32
    %c0_i32_20 = arith.constant 0 : i32
    %30 = arith.cmpi ne, %29, %c0_i32_20 : i32
    scf.if %30 {
      %c0_21 = arith.constant 0 : index
      %c0_22 = arith.constant 0 : index
      %31 = vector.load %arg5[%c0_21, %c0_22] : memref<32x32xf32, #tpu.memory_space<vmem>>, vector<32x32xf32>
      %c0_23 = arith.constant 0 : index
      %c0_24 = arith.constant 0 : index
      %32 = vector.load %arg4[%c0_23, %c0_24] : memref<32x32xf32, #tpu.memory_space<vmem>>, vector<32x32xf32>
      %33 = arith.mulf %31, %32 : vector<32x32xf32>
      %c0_25 = arith.constant 0 : index
      %c0_26 = arith.constant 0 : index
      %34 = vector.load %arg5[%c0_25, %c0_26] : memref<32x32xf32, #tpu.memory_space<vmem>>, vector<32x32xf32>
      tpu.vector_store %arg5[%c0_25, %c0_26], %33 {strides = array<i32>} : memref<32x32xf32, #tpu.memory_space<vmem>>, vector<32x32xf32>,
    } else {
    }
    return
  }
  func.func @transform_0(%arg0: i32) -> (i32, i32) {
    %c0_i32 = arith.constant 0 : i32
    %c0_i32_0 = arith.constant 0 : i32
    return %arg0, %c0_i32 : i32, i32
  }
  func.func @transform_1(%arg0: i32) -> (i32, i32) {
    %c0_i32 = arith.constant 0 : i32
    %c0_i32_0 = arith.constant 0 : i32
    %c0_i32_1 = arith.constant 0 : i32
    return %c0_i32, %c0_i32_0 : i32, i32
  }
  func.func @transform_2(%arg0: i32) -> (i32, i32) {
    %c0_i32 = arith.constant 0 : i32
    %c0_i32_0 = arith.constant 0 : i32
    %c0_i32_1 = arith.constant 0 : i32
    return %c0_i32, %c0_i32_0 : i32, i32
  }
  func.func @transform_3(%arg0: i32) -> (i32, i32) {
    %c0_i32 = arith.constant 0 : i32
    %c0_i32_0 = arith.constant 0 : i32
    %c0_i32_1 = arith.constant 0 : i32
    return %c0_i32, %c0_i32_0 : i32, i32
  }
  func.func @transform_4(%arg0: i32) -> (i32, i32) {
    %c0_i32 = arith.constant 0 : i32
    %c0_i32_0 = arith.constant 0 : i32
    %c0_i32_1 = arith.constant 0 : i32
    return %c0_i32, %c0_i32_0 : i32, i32
  }
  func.func @transform_5(%arg0: i32) -> (i32, i32) {
    %c0_i32 = arith.constant 0 : i32
    %c0_i32_0 = arith.constant 0 : i32
    %c0_i32_1 = arith.constant 0 : i32
    return %c0_i32, %c0_i32_0 : i32, i32
  }
}

</mosaic_0001>

<llo_original>
// kernel: tpu_custom_call.1
$region0: #{tpu_custom_call.1}
  #allocation0 [shape = 'u32[]', space=smem, size = 0x4, offset = 0x4, fixed_abs, tag = 'smem constant byte address 0x4 - core index']
  #allocation1 [shape = 'u32[72,128]{1,0:T(1,128)}', space=vmem, size = 0x9000, scoped, tag = 'internal scratch']
  %s0 = inlined_call_operand.vmem [shape: f32[64,32], index: 0, kind: input, shape index: {}]
  %s1 = inlined_call_operand.vmem [shape: f32[32,64], index: 1, kind: input, shape index: {}]
  %s2 = inlined_call_operand.vmem [shape: f32[1,64], index: 2, kind: input, shape index: {}]
  %s3 = inlined_call_operand.vmem [shape: f32[32,32], index: 3, kind: input, shape index: {}]
  %s4 = inlined_call_operand.hbm [shape: f32[32,32], index: 4, kind: output, shape index: {0}]
  %s5 = inlined_call_operand.hbm [shape: f32[1,32], index: 5, kind: output, shape index: {1}]
  %6 = xla_tuple %s4, %s5
  %s7 = sld [smem:[#allocation0]]
  $region42: #{tpu_custom_call.1} parent=0
    _
  %s9 = ssub.s32 1, %s7
  %s10 = scalar_select 0, %s9, %s7
  $region1: #{tpu_custom_call.1} parent=0
    #allocation2 [shape = 'u8[16384]{0}', space=vmem, size = 0x4000, scoped, tag = 'output window, operand 0, single buffered']
    #allocation3 [shape = 's32[1]{0}', space=sflag, size = 0x4, scoped, tag = 'scoped memory for tpu_custom_call.1']
    #allocation4 [shape = 'u8[512]{0}', space=vmem, size = 0x400, scoped, tag = 'output window, operand 1, single buffered']
    #allocation5 [shape = 's32[1]{0}', space=sflag, size = 0x4, scoped, tag = 'scoped memory for tpu_custom_call.1']
    %11 = vsyncpa [#allocation3], 0
    %12 = vsyncpa [#allocation5], 0
    // Predicated region
    $region2: #{tpu_custom_call.1} parent=1 // pred_check
      _
    $region3: #{tpu_custom_call.1} parent=1 // pred_check_branch
      %14 = sbr.rel (0) target = $region5
    $region4: #{tpu_custom_call.1} parent=1 // pred_region
      _
    $region5: #{tpu_custom_call.1} parent=1 // pred_fallthru
      _
    // Predicated region
    $region6: #{tpu_custom_call.1} parent=1 // pred_check
      _
    $region7: #{tpu_custom_call.1} parent=1 // pred_check_branch
      %16 = sbr.rel (0) target = $region9
    $region8: #{tpu_custom_call.1} parent=1 // pred_region
      _
    $region9: #{tpu_custom_call.1} parent=1 // pred_fallthru
      _
    // Predicated region
    $region10: #{tpu_custom_call.1} parent=1 // pred_check
      _
    $region11: #{tpu_custom_call.1} parent=1 // pred_check_branch
      %18 = sbr.rel (0) target = $region13
    $region12: #{tpu_custom_call.1} parent=1 // pred_region
      _
    $region13: #{tpu_custom_call.1} parent=1 // pred_fallthru
      _
    // Predicated region
    $region14: #{tpu_custom_call.1} parent=1 // pred_check
      _
    $region15: #{tpu_custom_call.1} parent=1 // pred_check_branch
      %20 = sbr.rel (0) target = $region17
    $region16: #{tpu_custom_call.1} parent=1 // pred_region
      _
    $region17: #{tpu_custom_call.1} parent=1 // pred_fallthru
      _
    %p21 = scmp.eq.s32.totalorder 0, 0
    // Predicated region
    $region18: #{tpu_custom_call.1} parent=1 // pred_check
      %p22 = pneg %p21
    $region19: #{tpu_custom_call.1} parent=1 // pred_check_branch
      %24 = sbr.rel (%p22) target = $region21
    $region20: #{tpu_custom_call.1} parent=1 // pred_region
      %vm25 = vcmask 261120
      %26 = vst.msk [vmem:[#allocation2] sm:$0xff] %vm25, 0.0
      %27 = vst.msk [vmem:[#allocation2 + $0x8] sm:$0xff] %vm25, 0.0
      %28 = vst.msk [vmem:[#allocation2 + $0x10] sm:$0xff] %vm25, 0.0
      %29 = vst.msk [vmem:[#allocation2 + $0x18] sm:$0xff] %vm25, 0.0
      %vm30 = vcmask 253952
      %31 = vst.msk [vmem:[#allocation4] sm:$0x1] %vm30, 0.0
    $region21: #{tpu_custom_call.1} parent=1 // pred_fallthru
      _
    %v32 = vld [vmem:[%s0] sm:$0xff]
    %v33 = vld [vmem:[%s0 + $0x8] sm:$0xff]
    %v34 = vld [vmem:[%s0 + $0x10] sm:$0xff]
    %v35 = vld [vmem:[%s0 + $0x18] sm:$0xff]
    %v36 = vld [vmem:[%s0 + $0x20] sm:$0xff]
    %v37 = vld [vmem:[%s0 + $0x28] sm:$0xff]
    %v38 = vld [vmem:[%s0 + $0x30] sm:$0xff]
    %v39 = vld [vmem:[%s0 + $0x38] sm:$0xff]
    %v40 = vld [vmem:[%s1] sm:$0xff]
    %v41 = vld [vmem:[%s1 + $0x8] sm:$0xff]
    %v42 = vld [vmem:[%s1 + $0x10] sm:$0xff]
    %v43 = vld [vmem:[%s1 + $0x18] sm:$0xff]
    %v44 = vld [vmem:[%s2] sm:$0x1]
    %v46 = vperm.slane %v44, 0
    %vm48 = vcmask 261120
    %v50 = vsel %vm48, %v32, 0
    %v53 = vsel %vm48, %v33, 0
    %v56 = vsel %vm48, %v34, 0
    %v59 = vsel %vm48, %v35, 0
    %v62 = vsel %vm48, %v36, 0
    %v65 = vsel %vm48, %v37, 0
    %v68 = vsel %vm48, %v38, 0
    %v71 = vsel %vm48, %v39, 0
    %73 = vmatpush.msra.mxu0 0.0
    %74 = vmatpush.msra.mxu0 0.0
    %75 = vmatpush.msra.mxu0 0.0
    %76 = vmatpush.msra.mxu0 0.0
    %77 = vmatpush.msra.mxu0 0.0
    %78 = vmatpush.msra.mxu0 0.0
    %79 = vmatpush.msra.mxu0 0.0
    %80 = vmatpush.msra.mxu0 0.0
    %81 = vmatpush.msra.mxu0 0.0
    %82 = vmatpush.msra.mxu0 0.0
    %83 = vmatpush.msra.mxu0 0.0
    %84 = vmatpush.msra.mxu0 0.0
    %85 = vmatpush.msra.mxu0 %v43
    %86 = vmatpush.msra.mxu0 %v42
    %87 = vmatpush.msra.mxu0 %v41
    %88 = vmatpush.msra.mxu0 %v40
    %89 = vmatmul.f32.gmra.mxu0 %v50
    %v90 = vpop.f32.mrf.mxu0
    %v91 = vadd.f32 %v46, %v90
    %92 = vmatmul.f32.gmra.mxu0 %v53
    %v93 = vpop.f32.mrf.mxu0
    %v94 = vadd.f32 %v46, %v93
    %95 = vmatmul.f32.gmra.mxu0 %v56
    %v96 = vpop.f32.mrf.mxu0
    %v97 = vadd.f32 %v46, %v96
    %98 = vmatmul.f32.gmra.mxu0 %v59
    %v99 = vpop.f32.mrf.mxu0
    %v100 = vadd.f32 %v46, %v99
    %101 = vmatmul.f32.gmra.mxu0 %v62
    %v102 = vpop.f32.mrf.mxu0
    %v103 = vadd.f32 %v46, %v102
    %104 = vmatmul.f32.gmra.mxu0 %v65
    %v105 = vpop.f32.mrf.mxu0
    %v106 = vadd.f32 %v46, %v105
    %107 = vmatmul.f32.gmra.mxu0 %v68
    %v108 = vpop.f32.mrf.mxu0
    %v109 = vadd.f32 %v46, %v108
    %110 = vmatmul.f32.gmra.mxu0 %v71
    %v111 = vpop.f32.mrf.mxu0
    %v112 = vadd.f32 %v46, %v111
    %113 = vdwg.mxu0
    %vm114 = vcmp.gt.f32.partialorder %v91, 0.0
    %vm115 = vcmp.gt.f32.partialorder %v94, 0.0
    %vm116 = vcmp.gt.f32.partialorder %v97, 0.0
    %vm117 = vcmp.gt.f32.partialorder %v100, 0.0
    %vm118 = vcmp.gt.f32.partialorder %v103, 0.0
    %vm119 = vcmp.gt.f32.partialorder %v106, 0.0
    %vm120 = vcmp.gt.f32.partialorder %v109, 0.0
    %vm121 = vcmp.gt.f32.partialorder %v112, 0.0
    %v122 = vadd.f32 %v91, 1.0
    %v123 = vadd.f32 %v94, 1.0
    %v124 = vadd.f32 %v97, 1.0
    %v125 = vadd.f32 %v100, 1.0
    %v126 = vadd.f32 %v103, 1.0
    %v127 = vadd.f32 %v106, 1.0
    %v128 = vadd.f32 %v109, 1.0
    %v129 = vadd.f32 %v112, 1.0
    %v130 = vmin.f32 %v91, 0.0
    %v131 = vmin.f32 %v94, 0.0
    %v132 = vmin.f32 %v97, 0.0
    %v133 = vmin.f32 %v100, 0.0
    %v134 = vmin.f32 %v103, 0.0
    %v135 = vmin.f32 %v106, 0.0
    %v136 = vmin.f32 %v109, 0.0
    %v137 = vmin.f32 %v112, 0.0
    %v138 = vmul.f32 %v130, 1.442695
    %v139 = vpow.pop %v138
    %v140 = vmul.f32 %v131, 1.442695
    %v141 = vpow.pop %v140
    %v142 = vmul.f32 %v132, 1.442695
    %v143 = vpow.pop %v142
    %v144 = vmul.f32 %v133, 1.442695
    %v145 = vpow.pop %v144
    %v146 = vmul.f32 %v134, 1.442695
    %v147 = vpow.pop %v146
    %v148 = vmul.f32 %v135, 1.442695
    %v149 = vpow.pop %v148
    %v150 = vmul.f32 %v136, 1.442695
    %v151 = vpow.pop %v150
    %v152 = vmul.f32 %v137, 1.442695
    %v153 = vpow.pop %v152
    %v154 = vsel %vm114, %v122, %v139
    %v155 = vsel %vm115, %v123, %v141
    %v156 = vsel %vm116, %v124, %v143
    %v157 = vsel %vm117, %v125, %v145
    %v158 = vsel %vm118, %v126, %v147
    %v159 = vsel %vm119, %v127, %v149
    %v160 = vsel %vm120, %v128, %v151
    %v161 = vsel %vm121, %v129, %v153
    %v162 = vld [vmem:[#allocation2] sm:$0xff]
    %v163 = vld [vmem:[#allocation2 + $0x8] sm:$0xff]
    %v164 = vld [vmem:[#allocation2 + $0x10] sm:$0xff]
    %v165 = vld [vmem:[#allocation2 + $0x18] sm:$0xff]
    %166 = vxpose.xlu0.b32.start [1/16] %v154, 128
    %167 = vxpose.xlu0.b32.cont [2/16] %v155, 128
    %168 = vxpose.xlu0.b32.cont [3/16] %v156, 128
    %169 = vxpose.xlu0.b32.cont [4/16] %v157, 128
    %170 = vxpose.xlu0.b32.cont [5/16] %v158, 128
    %171 = vxpose.xlu0.b32.cont [6/16] %v159, 128
    %172 = vxpose.xlu0.b32.cont [7/16] %v160, 128
    %173 = vxpose.xlu0.b32.cont [8/16] %v161, 128
    %174 = vxpose.xlu0.b32.cont [9/16] 0.0, 128
    %175 = vxpose.xlu0.b32.cont [10/16] 0.0, 128
    %176 = vxpose.xlu0.b32.cont [11/16] 0.0, 128
    %177 = vxpose.xlu0.b32.cont [12/16] 0.0, 128
    %178 = vxpose.xlu0.b32.cont [13/16] 0.0, 128
    %179 = vxpose.xlu0.b32.cont [14/16] 0.0, 128
    %180 = vxpose.xlu0.b32.cont [15/16] 0.0, 128
    %181 = vxpose.xlu0.b32.end [16/16] 0.0, 128
    %v182 = vpop.trf.xlu0
    %v183 = vpop.trf.xlu0
    %v184 = vpop.trf.xlu0
    %v185 = vpop.trf.xlu0
    %v186 = vpop.trf.xlu0
    %v187 = vpop.trf.xlu0
    %v188 = vpop.trf.xlu0
    %v189 = vpop.trf.xlu0
    %v190 = vpop.trf.xlu0
    %v191 = vpop.trf.xlu0
    %v192 = vpop.trf.xlu0
    %v193 = vpop.trf.xlu0
    %v194 = vpop.trf.xlu0
    %v195 = vpop.trf.xlu0
    %v196 = vpop.trf.xlu0
    %v197 = vpop.trf.xlu0
    %206 = vrot.lane.b32.xlu0 %v91, 96
    %v207 = vpop.permute.xlu0 %206
    %208 = vrot.lane.b32.xlu0 %v94, 96
    %v209 = vpop.permute.xlu0 %208
    %210 = vrot.lane.b32.xlu0 %v97, 96
    %v211 = vpop.permute.xlu0 %210
    %212 = vrot.lane.b32.xlu0 %v100, 96
    %v213 = vpop.permute.xlu0 %212
    %214 = vrot.lane.b32.xlu0 %v103, 96
    %v215 = vpop.permute.xlu0 %214
    %216 = vrot.lane.b32.xlu0 %v106, 96
    %v217 = vpop.permute.xlu0 %216
    %218 = vrot.lane.b32.xlu0 %v109, 96
    %v219 = vpop.permute.xlu0 %218
    %220 = vrot.lane.b32.xlu0 %v112, 96
    %v221 = vpop.permute.xlu0 %220
    %vm230 = vcmask 523264
    %v232 = vsel %vm230, %v182, 0
    %v235 = vsel %vm230, %v183, 0
    %v238 = vsel %vm230, %v184, 0
    %v241 = vsel %vm230, %v185, 0
    %243 = vmatpush.msra.mxu0 0.0
    %244 = vmatpush.msra.mxu0 0.0
    %245 = vmatpush.msra.mxu0 0.0
    %246 = vmatpush.msra.mxu0 0.0
    %247 = vmatpush.msra.mxu0 0.0
    %248 = vmatpush.msra.mxu0 0.0
    %249 = vmatpush.msra.mxu0 0.0
    %250 = vmatpush.msra.mxu0 0.0
    %251 = vmatpush.msra.mxu0 %v221
    %252 = vmatpush.msra.mxu0 %v219
    %253 = vmatpush.msra.mxu0 %v217
    %254 = vmatpush.msra.mxu0 %v215
    %255 = vmatpush.msra.mxu0 %v213
    %256 = vmatpush.msra.mxu0 %v211
    %257 = vmatpush.msra.mxu0 %v209
    %258 = vmatpush.msra.mxu0 %v207
    %259 = vmatmul.f32.gmra.mxu0 %v232
    %v260 = vpop.f32.mrf.mxu0
    %v261 = vadd.f32 0.0, %v260
    %262 = vmatmul.f32.gmra.mxu0 %v235
    %v263 = vpop.f32.mrf.mxu0
    %v264 = vadd.f32 0.0, %v263
    %265 = vmatmul.f32.gmra.mxu0 %v238
    %v266 = vpop.f32.mrf.mxu0
    %v267 = vadd.f32 0.0, %v266
    %268 = vmatmul.f32.gmra.mxu0 %v241
    %v269 = vpop.f32.mrf.mxu0
    %v270 = vadd.f32 0.0, %v269
    %271 = vdwg.mxu0
    %v272 = vadd.f32 %v162, %v261
    %v273 = vadd.f32 %v163, %v264
    %v274 = vadd.f32 %v164, %v267
    %v275 = vadd.f32 %v165, %v270
    %276 = vst.msk [vmem:[#allocation2] sm:$0xff] %vm48, %v272
    %277 = vst.msk [vmem:[#allocation2 + $0x8] sm:$0xff] %vm48, %v273
    %278 = vst.msk [vmem:[#allocation2 + $0x10] sm:$0xff] %vm48, %v274
    %279 = vst.msk [vmem:[#allocation2 + $0x18] sm:$0xff] %vm48, %v275
    %v280 = vld [vmem:[#allocation4] sm:$0x1]
    %v281 = vsel %vm48, %v154, 0.0
    %v282 = vsel %vm48, %v155, 0.0
    %v283 = vadd.f32 %v281, %v282
    %v284 = vsel %vm48, %v156, 0.0
    %v285 = vadd.f32 %v283, %v284
    %v286 = vsel %vm48, %v157, 0.0
    %v287 = vadd.f32 %v285, %v286
    %v288 = vsel %vm48, %v158, 0.0
    %v289 = vadd.f32 %v287, %v288
    %v290 = vsel %vm48, %v159, 0.0
    %v291 = vadd.f32 %v289, %v290
    %v292 = vsel %vm48, %v160, 0.0
    %v293 = vadd.f32 %v291, %v292
    %v294 = vsel %vm48, %v161, 0.0
    %v295 = vadd.f32 %v293, %v294
    %v296 = vrot.slane %v295, 4
    %v297 = vadd.f32 %v295, %v296
    %v298 = vrot.slane %v297, 2
    %v299 = vadd.f32 %v297, %v298
    %v300 = vrot.slane %v299, 1
    %v301 = vadd.f32 %v299, %v300
    %v302 = vadd.f32 %v280, %v301
    %vm303 = vcmask 253952
    %304 = vst.msk [vmem:[#allocation4] sm:$0x1] %vm303, %v302
    // Predicated region
    $region22: #{tpu_custom_call.1} parent=1 // pred_check
      %p305 = pneg %p21
    $region23: #{tpu_custom_call.1} parent=1 // pred_check_branch
      %307 = sbr.rel (%p305) target = $region25
    $region24: #{tpu_custom_call.1} parent=1 // pred_region
      %v308 = vld [vmem:[#allocation2] sm:$0xff]
      %v309 = vld [vmem:[#allocation2 + $0x8] sm:$0xff]
      %v310 = vld [vmem:[#allocation2 + $0x10] sm:$0xff]
      %v311 = vld [vmem:[#allocation2 + $0x18] sm:$0xff]
      %v312 = vld [vmem:[%s3] sm:$0xff]
      %v313 = vld [vmem:[%s3 + $0x8] sm:$0xff]
      %v314 = vld [vmem:[%s3 + $0x10] sm:$0xff]
      %v315 = vld [vmem:[%s3 + $0x18] sm:$0xff]
      %v316 = vmul.f32 %v308, %v312
      %v317 = vmul.f32 %v309, %v313
      %v318 = vmul.f32 %v310, %v314
      %v319 = vmul.f32 %v311, %v315
      %320 = vst.msk [vmem:[#allocation2] sm:$0xff] %vm48, %v316
      %321 = vst.msk [vmem:[#allocation2 + $0x8] sm:$0xff] %vm48, %v317
      %322 = vst.msk [vmem:[#allocation2 + $0x10] sm:$0xff] %vm48, %v318
      %323 = vst.msk [vmem:[#allocation2 + $0x18] sm:$0xff] %vm48, %v319
    $region25: #{tpu_custom_call.1} parent=1 // pred_fallthru
      _
    // Predicated region
    $region26: #{tpu_custom_call.1} parent=1 // pred_check
      _
    $region27: #{tpu_custom_call.1} parent=1 // pred_check_branch
      %325 = sbr.rel (0) target = $region29
    $region28: #{tpu_custom_call.1} parent=1 // pred_region
      %327 = vsyncadd [#allocation3], 0
      %s328 = sshll.u32 [#allocation2], 4
      %s329 = int_to_ptr.vmem [resolvable:$true] %s328
      %s330 = sshll.u32 %s4, 4
      %s331 = int_to_ptr.hbm [resolvable:$true] %s330
      %336 = dma.vmem_to_hbm [thread:$0]  %s329, 512, %s331, [#allocation3], 128, 128, 8
    $region29: #{tpu_custom_call.1} parent=1 // pred_fallthru
      _
    // Predicated region
    $region30: #{tpu_custom_call.1} parent=1 // pred_check
      _
    $region31: #{tpu_custom_call.1} parent=1 // pred_check_branch
      %338 = sbr.rel (0) target = $region33
    $region32: #{tpu_custom_call.1} parent=1 // pred_region
      %340 = vsyncadd [#allocation5], 0
      %s342 = sshll.u32 [#allocation4], 4
      %s343 = int_to_ptr.vmem [resolvable:$true] %s342
      %s344 = sshll.u32 %s5, 4
      %s345 = int_to_ptr.hbm [resolvable:$true] %s344
      %347 = dma.vmem_to_hbm [thread:$0]  %s343, 16, %s345, [#allocation5]
    $region33: #{tpu_custom_call.1} parent=1 // pred_fallthru
      _
    // Predicated region
    $region34: #{tpu_custom_call.1} parent=1 // pred_check
      _
    $region35: #{tpu_custom_call.1} parent=1 // pred_check_branch
      %349 = sbr.rel (0) target = $region37
    $region36: #{tpu_custom_call.1} parent=1 // pred_region
      %351 = dma.done [#allocation3], 512
    $region37: #{tpu_custom_call.1} parent=1 // pred_fallthru
      _
    // Predicated region
    $region38: #{tpu_custom_call.1} parent=1 // pred_check
      _
    $region39: #{tpu_custom_call.1} parent=1 // pred_check_branch
      %353 = sbr.rel (0) target = $region41
    $region40: #{tpu_custom_call.1} parent=1 // pred_region
      %355 = dma.done [#allocation5], 16
    $region41: #{tpu_custom_call.1} parent=1 // pred_fallthru
      _
    %356 = vsyncpa [#allocation3], 1
    %357 = vsyncpa [#allocation5], 1

</llo_original>
